<compile_context>
chip_gen: v7x
topology: tpu7x:2x2x1
jax: 0.10.0
libtpu: 0.0.40
codegen_flags: <defaults>
</compile_context>

<pallas_src>
import jax
import jax.numpy as jnp
from jax import lax
from jax.experimental import pallas as pl
from jax.experimental.pallas import tpu as pltpu


def _cat_addmm_kernel(packed_ref, out_ref):
    # packed (8, 2): rows 0-1 = x, rows 2-3 = A, rows 4-5 = B,
    #                rows 6-7 = [t2; t2] (t2 duplicated).
    p = packed_ref[...]
    x = p[0:2, :]
    a = p[2:4, :]
    b = p[4:6, :]
    t2_dup = p[6:8, :]                       # [t2; t2]

    # K=2 matmul on the VPU: x + a[:,0]*b[0,:] + a[:,1]*b[1,:]  (no MXU).
    t1 = x + a[:, 0:1] * b[0:1, :] + a[:, 1:2] * b[1:2, :]

    # [t2; 2*t2] via a row-indexed scale (keeps everything on the VPU).
    row = lax.broadcasted_iota(jnp.int32, (2, 2), 0)
    tail = t2_dup * jnp.where(row == 0, jnp.float32(1.0), jnp.float32(2.0))

    # Single coalesced store of the whole (4,2) tile.
    out_ref[...] = jnp.concatenate([t1, tail], axis=0)


def cat_addmm(x, a, b, t2):
    """x:(2,2), a:(2,2), b:(2,2), t2:(1,2) -> (4,2) float32."""
    # Pack everything into one VMEM input -> one DMA + one semaphore wait.
    packed = jnp.concatenate([x, a, b, t2, t2], axis=0).astype(jnp.float32)  # (8, 2)
    vmem = pl.BlockSpec(memory_space=pltpu.MemorySpace.VMEM)
    return pl.pallas_call(
        _cat_addmm_kernel,
        out_shape=jax.ShapeDtypeStruct((4, 2), jnp.float32),
        in_specs=[vmem],
        out_specs=vmem,
    )(packed)


if __name__ == "__main__":
    key = jax.random.PRNGKey(0)
    kx, ka, kb, kt = jax.random.split(key, 4)

    x = jax.random.normal(kx, (2, 2), dtype=jnp.float32)       # module input
    a = jax.random.normal(ka, (2, 2), dtype=jnp.float32)       # torch.randn(2,2)
    b = jax.random.normal(kb, (2, 2), dtype=jnp.float32)       # torch.randn(2,2)
    t2 = jax.random.uniform(kt, (1, 2), dtype=jnp.float32)     # torch.rand(2)

    out = cat_addmm(x, a, b, t2)
    jax.block_until_ready(out)

    # Pure-JAX reference check.
    ref = jnp.concatenate(
        [x + a @ b, jnp.concatenate([t2, t2 * 2.0], axis=0)], axis=0)
    assert jnp.allclose(out, ref, atol=1e-5, rtol=1e-5), (out, ref)

    print("KERNEL_OK")
</pallas_src>

<mosaic_0001>
module attributes {stable_mosaic.version = 11 : i64} {
  func.func @_cat_addmm_kernel(%arg0: memref<8x2xf32, #tpu.memory_space<vmem>>, %arg1: memref<4x2xf32, #tpu.memory_space<vmem>>) attributes {dimension_semantics = [], scalar_prefetch = 0 : i64, scratch_operands = 0 : i64, tpu.core_type = #tpu.core_type<tc>} {
    %c0 = arith.constant 0 : index
    %c0_0 = arith.constant 0 : index
    %0 = vector.load %arg0[%c0, %c0_0] : memref<8x2xf32, #tpu.memory_space<vmem>>, vector<8x2xf32>
    %1 = vector.extract_strided_slice %0 {offsets = [0, 0], sizes = [2, 2], strides = [1, 1]} : vector<8x2xf32> to vector<2x2xf32>
    %2 = vector.extract_strided_slice %0 {offsets = [2, 0], sizes = [2, 2], strides = [1, 1]} : vector<8x2xf32> to vector<2x2xf32>
    %3 = vector.extract_strided_slice %0 {offsets = [4, 0], sizes = [2, 2], strides = [1, 1]} : vector<8x2xf32> to vector<2x2xf32>
    %4 = vector.extract_strided_slice %0 {offsets = [6, 0], sizes = [2, 2], strides = [1, 1]} : vector<8x2xf32> to vector<2x2xf32>
    %5 = vector.extract_strided_slice %2 {offsets = [0, 0], sizes = [2, 1], strides = [1, 1]} : vector<2x2xf32> to vector<2x1xf32>
    %6 = vector.extract_strided_slice %3 {offsets = [0, 0], sizes = [1, 2], strides = [1, 1]} : vector<2x2xf32> to vector<1x2xf32>
    %7 = vector.broadcast %5 : vector<2x1xf32> to vector<2x2xf32>
    %8 = vector.broadcast %6 : vector<1x2xf32> to vector<2x2xf32>
    %9 = arith.mulf %7, %8 : vector<2x2xf32>
    %10 = arith.addf %1, %9 : vector<2x2xf32>
    %11 = vector.extract_strided_slice %2 {offsets = [0, 1], sizes = [2, 1], strides = [1, 1]} : vector<2x2xf32> to vector<2x1xf32>
    %12 = vector.extract_strided_slice %3 {offsets = [1, 0], sizes = [1, 2], strides = [1, 1]} : vector<2x2xf32> to vector<1x2xf32>
    %13 = vector.broadcast %11 : vector<2x1xf32> to vector<2x2xf32>
    %14 = vector.broadcast %12 : vector<1x2xf32> to vector<2x2xf32>
    %15 = arith.mulf %13, %14 : vector<2x2xf32>
    %16 = arith.addf %10, %15 : vector<2x2xf32>
    %17 = tpu.iota {dimensions = array<i32: 0>} : vector<2x2xi32>
    %c0_i32 = arith.constant 0 : i32
    %18 = vector.broadcast %c0_i32 : i32 to vector<2x2xi32>
    %19 = arith.cmpi eq, %17, %18 : vector<2x2xi32>
    %cst = arith.constant 1.000000e+00 : f32
    %cst_1 = arith.constant 2.000000e+00 : f32
    %20 = vector.broadcast %cst : f32 to vector<2x2xf32>
    %21 = vector.broadcast %cst_1 : f32 to vector<2x2xf32>
    %22 = arith.select %19, %20, %21 : vector<2x2xi1>, vector<2x2xf32>
    %23 = arith.mulf %4, %22 : vector<2x2xf32>
    %24 = tpu.concatenate %16, %23 in 0 : vector<2x2xf32>, vector<2x2xf32> -> vector<4x2xf32>
    %c0_2 = arith.constant 0 : index
    %c0_3 = arith.constant 0 : index
    %25 = vector.load %arg1[%c0_2, %c0_3] : memref<4x2xf32, #tpu.memory_space<vmem>>, vector<4x2xf32>
    tpu.vector_store %arg1[%c0_2, %c0_3], %24 {strides = array<i32>} : memref<4x2xf32, #tpu.memory_space<vmem>>, vector<4x2xf32>,
    return
  }
}

</mosaic_0001>

<llo_original>
// kernel: tpu_custom_call.1
$region0: #{tpu_custom_call.1}
  #allocation0 [shape = 'u32[]', space=smem, size = 0x4, offset = 0x4, fixed_abs, tag = 'smem constant byte address 0x4 - core index']
  #allocation1 [shape = 'u32[144,128]{1,0:T(1,128)}', space=vmem, size = 0x12000, scoped, tag = 'internal scratch']
  %s0 = inlined_call_operand.vmem [shape: f32[8,2], index: 0, kind: input, shape index: {}]
  %s1 = inlined_call_operand.vmem [shape: f32[4,2], index: 1, kind: output, shape index: {}]
  %s2 = sld [smem:[#allocation0]]
  $region14: #{tpu_custom_call.1} parent=0
    _
  %s4 = ssub.s32 1, %s2
  %s5 = scalar_select 0, %s4, %s2
  // Predicated region
  $region2: #{tpu_custom_call.1} parent=0 // pred_check
    _
  $region3: #{tpu_custom_call.1} parent=0 // pred_check_branch
    %7 = sbr.rel (0) target = $region5
  $region4: #{tpu_custom_call.1} parent=0 // pred_region
    _
  $region5: #{tpu_custom_call.1} parent=0 // pred_fallthru
    _
  %v8 = vld [vmem:[%s0] sm:$0xff]
  %10 = vset.pattern.permute.xlu0 0
  %11 = vperm.xlu0 %10, %v8
  %v12 = vpop.permute.xlu0 %11
  %v14 = vlaneseq
  %v15 = vshrl.u32 %v14, 7
  %v16 = vsub.s32 4, %v15
  %v17 = vrot.slane %v8, %v16
  %v18 = vmul.f32 %v12, %v17
  %v20 = vrot.slane %v18, 2
  %v22 = vadd.f32 %v8, %v20
  %23 = vset.pattern.permute.xlu0 1
  %24 = vperm.xlu0 %23, %v8
  %v25 = vpop.permute.xlu0 %24
  %v27 = vlaneseq
  %v28 = vshrl.u32 %v27, 7
  %v29 = vsub.s32 5, %v28
  %v30 = vrot.slane %v8, %v29
  %v31 = vmul.f32 %v25, %v30
  %v33 = vrot.slane %v31, 2
  %v35 = vadd.f32 %v22, %v33
  %v36 = vlaneseq
  %v37 = vshrl.u32 %v36, 7
  %vm38 = vcmp.eq.s32.totalorder %v37, 0
  %v39 = vsel %vm38, 1.0, 2.0
  %v41 = vrot.slane %v39, 2
  %v43 = vmul.f32 %v8, %v41
  %v45 = vrot.slane %v43, 4
  %vm47 = vcmask 1041408
  %v48 = vsel %vm47, %v35, %v45
  %vm49 = vcmask 11264
  %50 = vst.msk [vmem:[%s1] sm:$0xf] %vm49, %v48
  // Predicated region
  $region6: #{tpu_custom_call.1} parent=0 // pred_check
    _
  $region7: #{tpu_custom_call.1} parent=0 // pred_check_branch
    %52 = sbr.rel (0) target = $region9
  $region8: #{tpu_custom_call.1} parent=0 // pred_region
    _
  $region9: #{tpu_custom_call.1} parent=0 // pred_fallthru
    _
  // Predicated region
  $region10: #{tpu_custom_call.1} parent=0 // pred_check
    _
  $region11: #{tpu_custom_call.1} parent=0 // pred_check_branch
    %54 = sbr.rel (0) target = $region13
  $region12: #{tpu_custom_call.1} parent=0 // pred_region
    _
  $region13: #{tpu_custom_call.1} parent=0 // pred_fallthru
    _

</llo_original>
